<compile_context>
chip_gen: v7x
topology: tpu7x:2x2x1
jax: 0.10.0
libtpu: 0.0.40
codegen_flags: <defaults>
</compile_context>

<pallas_src>
import jax
import jax.numpy as jnp
from jax.experimental import pallas as pl
from jax.experimental.pallas import tpu as pltpu


def _round_up(x, m):
    return ((x + m - 1) // m) * m


def _edge_classifier_kernel(x_ref,
                            w1_ref, b1_ref,
                            w2_ref, b2_ref,
                            w3_ref, b3_ref,
                            w4_ref, b4_ref,
                            o_ref):
    """Whole MLP fused: 4 MXU matmuls (bf16 in, f32 acc) + bias + ReLU chain."""
    cdt = x_ref.dtype  # matmul input dtype (bf16 by default)

    h = jnp.dot(x_ref[...], w1_ref[...],
                preferred_element_type=jnp.float32) + b1_ref[...]
    h = jnp.maximum(h, 0.0).astype(cdt)            # Dropout(eval)=id, then ReLU

    h = jnp.dot(h, w2_ref[...],
                preferred_element_type=jnp.float32) + b2_ref[...]
    h = jnp.maximum(h, 0.0).astype(cdt)

    h = jnp.dot(h, w3_ref[...],
                preferred_element_type=jnp.float32) + b3_ref[...]
    h = jnp.maximum(h, 0.0).astype(cdt)

    h = jnp.dot(h, w4_ref[...],
                preferred_element_type=jnp.float32) + b4_ref[...]
    o_ref[...] = h.astype(o_ref.dtype)


def edge_classifier_forward(x, params, *, block_n=1024,
                            matmul_dtype=jnp.bfloat16):
    """Runs the Edge_Classifier MLP with a single fused Pallas kernel.

    x: (N, 2*out_dim) float32 edge features; N may be any size.
    params: weights as (in, out) and biases as (1, out), float32.
    """
    n, d2 = x.shape
    w1, b1 = params["w1"], params["b1"]
    w2, b2 = params["w2"], params["b2"]
    w3, b3 = params["w3"], params["b3"]
    w4, b4 = params["w4"], params["b4"]
    d = w2.shape[1]
    c = w4.shape[1]

    # --- Lane-dense output: pad num_classes up to a multiple of 128. ---------
    c_pad = _round_up(c, 128)
    if c_pad != c:
        w4 = jnp.pad(w4, ((0, 0), (0, c_pad - c)))
        b4 = jnp.pad(b4, ((0, 0), (0, c_pad - c)))

    # --- Tile the edge axis: multiple of 8 sublanes, capped at block_n. ------
    block = min(_round_up(n, 8), _round_up(block_n, 8))
    n_pad = _round_up(n, block)
    if n_pad != n:
        x = jnp.pad(x, ((0, n_pad - n), (0, 0)))

    # --- bf16 matmul operands, f32 biases (bias + ReLU done in f32). ---------
    xc = x.astype(matmul_dtype)
    w1c, w2c, w3c, w4c = (w.astype(matmul_dtype) for w in (w1, w2, w3, w4))
    b1f, b2f, b3f, b4f = (b.astype(jnp.float32) for b in (b1, b2, b3, b4))

    grid = (n_pad // block,)

    def _fixed(i):  # weights/biases: same full block every grid step
        return (0, 0)

    out = pl.pallas_call(
        _edge_classifier_kernel,
        out_shape=jax.ShapeDtypeStruct((n_pad, c_pad), jnp.float32),
        grid_spec=pltpu.PrefetchScalarGridSpec(
            num_scalar_prefetch=0,
            grid=grid,
            in_specs=[
                pl.BlockSpec((block, d2), lambda i: (i, 0)),   # x tile over edges
                pl.BlockSpec((d2, d2), _fixed),                # W1
                pl.BlockSpec((1, d2), _fixed),                 # b1
                pl.BlockSpec((d2, d), _fixed),                 # W2
                pl.BlockSpec((1, d), _fixed),                  # b2
                pl.BlockSpec((d, d), _fixed),                  # W3
                pl.BlockSpec((1, d), _fixed),                  # b3
                pl.BlockSpec((d, c_pad), _fixed),              # W4 (padded)
                pl.BlockSpec((1, c_pad), _fixed),              # b4 (padded)
            ],
            out_specs=pl.BlockSpec((block, c_pad), lambda i: (i, 0)),
        ),
        compiler_params=pltpu.CompilerParams(
            dimension_semantics=("parallel",)),   # megacore-shardable on v7x
    )(xc, w1c, b1f, w2c, b2f, w3c, b3f, w4c, b4f)

    # Strip row padding and the zero class columns.
    return out[:n, :c]


def init_params(key, out_dim, num_classes):
    """Deterministic synthetic parameters matching nn.Linear shapes.

    PyTorch stores Linear weight as (out, in); kept here as (in, out) so the
    kernel computes y = x @ W + b.
    """
    d2 = 2 * out_dim
    ks = jax.random.split(key, 8)
    scale = 0.05
    return {
        "w1": scale * jax.random.normal(ks[0], (d2, d2), jnp.float32),
        "b1": scale * jax.random.normal(ks[1], (1, d2), jnp.float32),
        "w2": scale * jax.random.normal(ks[2], (d2, out_dim), jnp.float32),
        "b2": scale * jax.random.normal(ks[3], (1, out_dim), jnp.float32),
        "w3": scale * jax.random.normal(ks[4], (out_dim, out_dim), jnp.float32),
        "b3": scale * jax.random.normal(ks[5], (1, out_dim), jnp.float32),
        "w4": scale * jax.random.normal(ks[6], (out_dim, num_classes), jnp.float32),
        "b4": scale * jax.random.normal(ks[7], (1, num_classes), jnp.float32),
    }


def reference_forward(x, p):
    """Pure-JAX f32 reference (eval-mode dropout = identity)."""
    h = jnp.maximum(x @ p["w1"] + p["b1"], 0.0)
    h = jnp.maximum(h @ p["w2"] + p["b2"], 0.0)
    h = jnp.maximum(h @ p["w3"] + p["b3"], 0.0)
    return h @ p["w4"] + p["b4"]


def _check(out, ref, tag):
    rel_err = float(jnp.max(jnp.abs(out - ref)) / (jnp.max(jnp.abs(ref)) + 1e-9))
    assert rel_err < 5e-2, f"{tag}: mismatch vs reference, rel_err={rel_err}"


if __name__ == "__main__":
    out_dim = 32          # hidden size D (input feature size is 2*D = 64)
    num_classes = 29      # V-COCO action classes

    key = jax.random.PRNGKey(0)
    kx1, kx2, kp = jax.random.split(key, 3)
    params = init_params(kp, out_dim, num_classes)

    # Case 1: tiny, non-multiple-of-8 edge count (exercises row padding).
    n_small = 13
    x_small = jax.random.normal(kx1, (n_small, 2 * out_dim), jnp.float32)
    out_small = jax.block_until_ready(edge_classifier_forward(x_small, params))
    assert out_small.shape == (n_small, num_classes)
    _check(out_small, reference_forward(x_small, params), "small")

    # Case 2: larger edge count that spans multiple grid steps (exercises the
    # tiled/pipelined path with block_n smaller than N).
    n_big = 300
    x_big = jax.random.normal(kx2, (n_big, 2 * out_dim), jnp.float32)
    out_big = jax.block_until_ready(
        edge_classifier_forward(x_big, params, block_n=128))
    assert out_big.shape == (n_big, num_classes)
    _check(out_big, reference_forward(x_big, params), "big")

    print("KERNEL_OK")
</pallas_src>

<mosaic_0001>
module attributes {stable_mosaic.version = 11 : i64} {
  func.func @_edge_classifier_kernel(%arg0: i32, %arg1: memref<16x64xbf16, #tpu.memory_space<vmem>>, %arg2: memref<64x64xbf16, #tpu.memory_space<vmem>>, %arg3: memref<1x64xf32, #tpu.memory_space<vmem>>, %arg4: memref<64x32xbf16, #tpu.memory_space<vmem>>, %arg5: memref<1x32xf32, #tpu.memory_space<vmem>>, %arg6: memref<32x32xbf16, #tpu.memory_space<vmem>>, %arg7: memref<1x32xf32, #tpu.memory_space<vmem>>, %arg8: memref<32x128xbf16, #tpu.memory_space<vmem>>, %arg9: memref<1x128xf32, #tpu.memory_space<vmem>>, %arg10: memref<16x128xf32, #tpu.memory_space<vmem>>) attributes {dimension_semantics = [#tpu.dimension_semantics<parallel>], iteration_bounds = array<i64: 1>, scalar_prefetch = 0 : i64, scratch_operands = 0 : i64, tpu.core_type = #tpu.core_type<tc>, window_params = [{transform_indices = @transform_0, window_bounds = array<i64: 16, 64>}, {pipeline_mode = #tpu.pipeline_mode<synchronous>, transform_indices = @transform_1, window_bounds = array<i64: 64, 64>}, {pipeline_mode = #tpu.pipeline_mode<synchronous>, transform_indices = @transform_2, window_bounds = array<i64: 1, 64>}, {pipeline_mode = #tpu.pipeline_mode<synchronous>, transform_indices = @transform_3, window_bounds = array<i64: 64, 32>}, {pipeline_mode = #tpu.pipeline_mode<synchronous>, transform_indices = @transform_4, window_bounds = array<i64: 1, 32>}, {pipeline_mode = #tpu.pipeline_mode<synchronous>, transform_indices = @transform_5, window_bounds = array<i64: 32, 32>}, {pipeline_mode = #tpu.pipeline_mode<synchronous>, transform_indices = @transform_6, window_bounds = array<i64: 1, 32>}, {pipeline_mode = #tpu.pipeline_mode<synchronous>, transform_indices = @transform_7, window_bounds = array<i64: 32, 128>}, {pipeline_mode = #tpu.pipeline_mode<synchronous>, transform_indices = @transform_8, window_bounds = array<i64: 1, 128>}, {transform_indices = @transform_9, window_bounds = array<i64: 16, 128>}]} {
    %c0 = arith.constant 0 : index
    %c0_0 = arith.constant 0 : index
    %0 = vector.load %arg1[%c0, %c0_0] : memref<16x64xbf16, #tpu.memory_space<vmem>>, vector<16x64xbf16>
    %c0_1 = arith.constant 0 : index
    %c0_2 = arith.constant 0 : index
    %1 = vector.load %arg2[%c0_1, %c0_2] : memref<64x64xbf16, #tpu.memory_space<vmem>>, vector<64x64xbf16>
    %cst = arith.constant dense<0.000000e+00> : vector<16x64xf32>
    %2 = tpu.matmul %0, %1, %cst {dimension_numbers = #tpu.dot_dimension_numbers<[1], [0], [0], [1], [0, 0, 1, 1], [], []>} : vector<16x64xbf16>, vector<64x64xbf16>, vector<16x64xf32> -> vector<16x64xf32>
    %c0_3 = arith.constant 0 : index
    %c0_4 = arith.constant 0 : index
    %3 = vector.load %arg3[%c0_3, %c0_4] : memref<1x64xf32, #tpu.memory_space<vmem>>, vector<1x64xf32>
    %4 = vector.broadcast %3 : vector<1x64xf32> to vector<16x64xf32>
    %5 = arith.addf %2, %4 : vector<16x64xf32>
    %cst_5 = arith.constant 0.000000e+00 : f32
    %6 = vector.broadcast %cst_5 : f32 to vector<16x64xf32>
    %7 = arith.maximumf %5, %6 : vector<16x64xf32>
    %8 = arith.truncf %7 : vector<16x64xf32> to vector<16x64xbf16>
    %c0_6 = arith.constant 0 : index
    %c0_7 = arith.constant 0 : index
    %9 = vector.load %arg4[%c0_6, %c0_7] : memref<64x32xbf16, #tpu.memory_space<vmem>>, vector<64x32xbf16>
    %cst_8 = arith.constant dense<0.000000e+00> : vector<16x32xf32>
    %10 = tpu.matmul %8, %9, %cst_8 {dimension_numbers = #tpu.dot_dimension_numbers<[1], [0], [0], [1], [0, 0, 1, 1], [], []>} : vector<16x64xbf16>, vector<64x32xbf16>, vector<16x32xf32> -> vector<16x32xf32>
    %c0_9 = arith.constant 0 : index
    %c0_10 = arith.constant 0 : index
    %11 = vector.load %arg5[%c0_9, %c0_10] : memref<1x32xf32, #tpu.memory_space<vmem>>, vector<1x32xf32>
    %12 = vector.broadcast %11 : vector<1x32xf32> to vector<16x32xf32>
    %13 = arith.addf %10, %12 : vector<16x32xf32>
    %cst_11 = arith.constant 0.000000e+00 : f32
    %14 = vector.broadcast %cst_11 : f32 to vector<16x32xf32>
    %15 = arith.maximumf %13, %14 : vector<16x32xf32>
    %16 = arith.truncf %15 : vector<16x32xf32> to vector<16x32xbf16>
    %c0_12 = arith.constant 0 : index
    %c0_13 = arith.constant 0 : index
    %17 = vector.load %arg6[%c0_12, %c0_13] : memref<32x32xbf16, #tpu.memory_space<vmem>>, vector<32x32xbf16>
    %cst_14 = arith.constant dense<0.000000e+00> : vector<16x32xf32>
    %18 = tpu.matmul %16, %17, %cst_14 {dimension_numbers = #tpu.dot_dimension_numbers<[1], [0], [0], [1], [0, 0, 1, 1], [], []>} : vector<16x32xbf16>, vector<32x32xbf16>, vector<16x32xf32> -> vector<16x32xf32>
    %c0_15 = arith.constant 0 : index
    %c0_16 = arith.constant 0 : index
    %19 = vector.load %arg7[%c0_15, %c0_16] : memref<1x32xf32, #tpu.memory_space<vmem>>, vector<1x32xf32>
    %20 = vector.broadcast %19 : vector<1x32xf32> to vector<16x32xf32>
    %21 = arith.addf %18, %20 : vector<16x32xf32>
    %cst_17 = arith.constant 0.000000e+00 : f32
    %22 = vector.broadcast %cst_17 : f32 to vector<16x32xf32>
    %23 = arith.maximumf %21, %22 : vector<16x32xf32>
    %24 = arith.truncf %23 : vector<16x32xf32> to vector<16x32xbf16>
    %c0_18 = arith.constant 0 : index
    %c0_19 = arith.constant 0 : index
    %25 = vector.load %arg8[%c0_18, %c0_19] : memref<32x128xbf16, #tpu.memory_space<vmem>>, vector<32x128xbf16>
    %cst_20 = arith.constant dense<0.000000e+00> : vector<16x128xf32>
    %26 = tpu.matmul %24, %25, %cst_20 {dimension_numbers = #tpu.dot_dimension_numbers<[1], [0], [0], [1], [0, 0, 1, 1], [], []>} : vector<16x32xbf16>, vector<32x128xbf16>, vector<16x128xf32> -> vector<16x128xf32>
    %c0_21 = arith.constant 0 : index
    %c0_22 = arith.constant 0 : index
    %27 = vector.load %arg9[%c0_21, %c0_22] : memref<1x128xf32, #tpu.memory_space<vmem>>, vector<1x128xf32>
    %28 = vector.broadcast %27 : vector<1x128xf32> to vector<16x128xf32>
    %29 = arith.addf %26, %28 : vector<16x128xf32>
    %c0_23 = arith.constant 0 : index
    %c0_24 = arith.constant 0 : index
    %30 = vector.load %arg10[%c0_23, %c0_24] : memref<16x128xf32, #tpu.memory_space<vmem>>, vector<16x128xf32>
    tpu.vector_store %arg10[%c0_23, %c0_24], %29 {strides = array<i32>} : memref<16x128xf32, #tpu.memory_space<vmem>>, vector<16x128xf32>,
    return
  }
  func.func @transform_0(%arg0: i32) -> (i32, i32) {
    %c0_i32 = arith.constant 0 : i32
    %c0_i32_0 = arith.constant 0 : i32
    return %arg0, %c0_i32 : i32, i32
  }
  func.func @transform_1(%arg0: i32) -> (i32, i32) {
    %c0_i32 = arith.constant 0 : i32
    %c0_i32_0 = arith.constant 0 : i32
    %c0_i32_1 = arith.constant 0 : i32
    return %c0_i32, %c0_i32_0 : i32, i32
  }
  func.func @transform_2(%arg0: i32) -> (i32, i32) {
    %c0_i32 = arith.constant 0 : i32
    %c0_i32_0 = arith.constant 0 : i32
    %c0_i32_1 = arith.constant 0 : i32
    return %c0_i32, %c0_i32_0 : i32, i32
  }
  func.func @transform_3(%arg0: i32) -> (i32, i32) {
    %c0_i32 = arith.constant 0 : i32
    %c0_i32_0 = arith.constant 0 : i32
    %c0_i32_1 = arith.constant 0 : i32
    return %c0_i32, %c0_i32_0 : i32, i32
  }
  func.func @transform_4(%arg0: i32) -> (i32, i32) {
    %c0_i32 = arith.constant 0 : i32
    %c0_i32_0 = arith.constant 0 : i32
    %c0_i32_1 = arith.constant 0 : i32
    return %c0_i32, %c0_i32_0 : i32, i32
  }
  func.func @transform_5(%arg0: i32) -> (i32, i32) {
    %c0_i32 = arith.constant 0 : i32
    %c0_i32_0 = arith.constant 0 : i32
    %c0_i32_1 = arith.constant 0 : i32
    return %c0_i32, %c0_i32_0 : i32, i32
  }
  func.func @transform_6(%arg0: i32) -> (i32, i32) {
    %c0_i32 = arith.constant 0 : i32
    %c0_i32_0 = arith.constant 0 : i32
    %c0_i32_1 = arith.constant 0 : i32
    return %c0_i32, %c0_i32_0 : i32, i32
  }
  func.func @transform_7(%arg0: i32) -> (i32, i32) {
    %c0_i32 = arith.constant 0 : i32
    %c0_i32_0 = arith.constant 0 : i32
    %c0_i32_1 = arith.constant 0 : i32
    return %c0_i32, %c0_i32_0 : i32, i32
  }
  func.func @transform_8(%arg0: i32) -> (i32, i32) {
    %c0_i32 = arith.constant 0 : i32
    %c0_i32_0 = arith.constant 0 : i32
    %c0_i32_1 = arith.constant 0 : i32
    return %c0_i32, %c0_i32_0 : i32, i32
  }
  func.func @transform_9(%arg0: i32) -> (i32, i32) {
    %c0_i32 = arith.constant 0 : i32
    %c0_i32_0 = arith.constant 0 : i32
    return %arg0, %c0_i32 : i32, i32
  }
}

</mosaic_0001>

<llo_original>
// kernel: tpu_custom_call.1
$region0: #{tpu_custom_call.1}
  #allocation0 [shape = 'u32[]', space=smem, size = 0x4, offset = 0x4, fixed_abs, tag = 'smem constant byte address 0x4 - core index']
  #allocation1 [shape = 'u32[144,128]{1,0:T(1,128)}', space=vmem, size = 0x12000, scoped, tag = 'internal scratch']
  %s0 = inlined_call_operand.hbm [shape: bf16[16,64], index: 0, kind: input, shape index: {}]
  %s1 = inlined_call_operand.vmem [shape: bf16[64,64], index: 1, kind: input, shape index: {}]
  %s2 = inlined_call_operand.vmem [shape: f32[1,64], index: 2, kind: input, shape index: {}]
  %s3 = inlined_call_operand.vmem [shape: bf16[64,32], index: 3, kind: input, shape index: {}]
  %s4 = inlined_call_operand.vmem [shape: f32[1,32], index: 4, kind: input, shape index: {}]
  %s5 = inlined_call_operand.vmem [shape: bf16[32,32], index: 5, kind: input, shape index: {}]
  %s6 = inlined_call_operand.vmem [shape: f32[1,32], index: 6, kind: input, shape index: {}]
  %s7 = inlined_call_operand.vmem [shape: bf16[32,128], index: 7, kind: input, shape index: {}]
  %s8 = inlined_call_operand.vmem [shape: f32[1,128], index: 8, kind: input, shape index: {}]
  %s9 = inlined_call_operand.hbm [shape: f32[16,128], index: 9, kind: output, shape index: {}]
  %s10 = sld [smem:[#allocation0]]
  $region50: #{tpu_custom_call.1} parent=0
    _
  %s12 = ssub.s32 1, %s10
  %s13 = scalar_select 0, %s12, %s10
  $region1: #{tpu_custom_call.1} parent=0
    #allocation2 [shape = 'u8[4096]{0}', space=vmem, size = 0x1000, scoped, tag = 'input window, operand 0, single buffered']
    #allocation3 [shape = 's32[1]{0}', space=sflag, size = 0x4, scoped, tag = 'scoped memory for tpu_custom_call.1']
    #allocation4 [shape = 's32[1]{0}', space=sflag, size = 0x4, scoped, tag = 'scoped memory for tpu_custom_call.1']
    #allocation5 [shape = 'u8[8192]{0}', space=vmem, size = 0x2000, scoped, tag = 'output window, operand 0, single buffered']
    %14 = vsyncpa [#allocation3], 0
    %15 = vsyncpa [#allocation4], 0
    // Predicated region
    $region2: #{tpu_custom_call.1} parent=1 // pred_check
      _
    $region3: #{tpu_custom_call.1} parent=1 // pred_check_branch
      %17 = sbr.rel (0) target = $region5
    $region4: #{tpu_custom_call.1} parent=1 // pred_region
      %s19 = ssub.s32 128, 128
      %20 = vsyncadd [#allocation3], %s19
      %s21 = sshll.u32 [#allocation2], 4
      %s22 = int_to_ptr.vmem [resolvable:$true] %s21
      %27 = dma.hbm_to_vmem [thread:$0]  %s0, 128, %s22, [#allocation3], 64, 64, 4
    $region5: #{tpu_custom_call.1} parent=1 // pred_fallthru
      _
    // Predicated region
    $region6: #{tpu_custom_call.1} parent=1 // pred_check
      _
    $region7: #{tpu_custom_call.1} parent=1 // pred_check_branch
      %29 = sbr.rel (0) target = $region9
    $region8: #{tpu_custom_call.1} parent=1 // pred_region
      _
    $region9: #{tpu_custom_call.1} parent=1 // pred_fallthru
      _
    // Predicated region
    $region10: #{tpu_custom_call.1} parent=1 // pred_check
      _
    $region11: #{tpu_custom_call.1} parent=1 // pred_check_branch
      %31 = sbr.rel (0) target = $region13
    $region12: #{tpu_custom_call.1} parent=1 // pred_region
      _
    $region13: #{tpu_custom_call.1} parent=1 // pred_fallthru
      _
    // Predicated region
    $region14: #{tpu_custom_call.1} parent=1 // pred_check
      _
    $region15: #{tpu_custom_call.1} parent=1 // pred_check_branch
      %33 = sbr.rel (0) target = $region17
    $region16: #{tpu_custom_call.1} parent=1 // pred_region
      _
    $region17: #{tpu_custom_call.1} parent=1 // pred_fallthru
      _
    // Predicated region
    $region18: #{tpu_custom_call.1} parent=1 // pred_check
      _
    $region19: #{tpu_custom_call.1} parent=1 // pred_check_branch
      %35 = sbr.rel (0) target = $region21
    $region20: #{tpu_custom_call.1} parent=1 // pred_region
      _
    $region21: #{tpu_custom_call.1} parent=1 // pred_fallthru
      _
    // Predicated region
    $region22: #{tpu_custom_call.1} parent=1 // pred_check
      _
    $region23: #{tpu_custom_call.1} parent=1 // pred_check_branch
      %37 = sbr.rel (0) target = $region25
    $region24: #{tpu_custom_call.1} parent=1 // pred_region
      _
    $region25: #{tpu_custom_call.1} parent=1 // pred_fallthru
      _
    // Predicated region
    $region26: #{tpu_custom_call.1} parent=1 // pred_check
      _
    $region27: #{tpu_custom_call.1} parent=1 // pred_check_branch
      %39 = sbr.rel (0) target = $region29
    $region28: #{tpu_custom_call.1} parent=1 // pred_region
      _
    $region29: #{tpu_custom_call.1} parent=1 // pred_fallthru
      _
    // Predicated region
    $region30: #{tpu_custom_call.1} parent=1 // pred_check
      _
    $region31: #{tpu_custom_call.1} parent=1 // pred_check_branch
      %41 = sbr.rel (0) target = $region33
    $region32: #{tpu_custom_call.1} parent=1 // pred_region
      _
    $region33: #{tpu_custom_call.1} parent=1 // pred_fallthru
      _
    // Predicated region
    $region34: #{tpu_custom_call.1} parent=1 // pred_check
      _
    $region35: #{tpu_custom_call.1} parent=1 // pred_check_branch
      %43 = sbr.rel (0) target = $region37
    $region36: #{tpu_custom_call.1} parent=1 // pred_region
      _
    $region37: #{tpu_custom_call.1} parent=1 // pred_fallthru
      _
    // Predicated region
    $region38: #{tpu_custom_call.1} parent=1 // pred_check
      _
    $region39: #{tpu_custom_call.1} parent=1 // pred_check_branch
      %45 = sbr.rel (0) target = $region41
    $region40: #{tpu_custom_call.1} parent=1 // pred_region
      %46 = dma.done [#allocation3], 128
    $region41: #{tpu_custom_call.1} parent=1 // pred_fallthru
      _
    %v48 = vld [vmem:[#allocation2] sm:$0xf]
    %v49 = vld [vmem:[#allocation2 + $0x4] sm:$0xf]
    %v50 = vld [vmem:[%s1] sm:$0xf]
    %v51 = vld [vmem:[%s1 + $0x4] sm:$0xf]
    %v52 = vld [vmem:[%s1 + $0x8] sm:$0xf]
    %v53 = vld [vmem:[%s1 + $0xc] sm:$0xf]
    %v54 = vld [vmem:[%s1 + $0x10] sm:$0xf]
    %v55 = vld [vmem:[%s1 + $0x14] sm:$0xf]
    %v56 = vld [vmem:[%s1 + $0x18] sm:$0xf]
    %v57 = vld [vmem:[%s1 + $0x1c] sm:$0xf]
    %v58 = vld [vmem:[%s2] sm:$0x1]
    %v60 = vlaneseq
    %v61 = vshrl.u32 %v60, 7
    %v62 = vsub.s32 0, %v61
    %v63 = vrot.slane %v58, %v62
    %v67 = vunpack.c.l.b16 %v48
    %v68 = vunpack.c.l.b16 %v49
    %v69 = vpack.c.b16 %v68, %v67
    %v78 = vunpack.c.l.b16 %v50
    %v79 = vunpack.c.l.b16 %v51
    %v80 = vunpack.c.l.b16 %v52
    %v81 = vunpack.c.l.b16 %v53
    %v82 = vunpack.c.l.b16 %v54
    %v83 = vunpack.c.l.b16 %v55
    %v84 = vunpack.c.l.b16 %v56
    %v85 = vunpack.c.l.b16 %v57
    %v86 = vpack.c.b16 %v79, %v78
    %v87 = vpack.c.b16 %v81, %v80
    %v88 = vpack.c.b16 %v83, %v82
    %v89 = vpack.c.b16 %v85, %v84
    %vm94 = vcmask 523264
    %v96 = vsel %vm94, %v69, 0
    %98 = vmatprep.subr.bf16.mxu0 0
    %99 = vmatpush1.bf16.msra.mxu0 %v86
    %100 = vmatprep.subr.bf16.mxu0 0
    %101 = vmatpush1.bf16.msra.mxu0 %v87
    %102 = vmatprep.subr.bf16.mxu0 0
    %103 = vmatpush1.bf16.msra.mxu0 %v88
    %104 = vmatprep.subr.bf16.mxu0 0
    %105 = vmatpush1.bf16.msra.mxu0 %v89
    %106 = vmatprep.subr.bf16.mxu0 0
    %107 = vmatpush1.bf16.msra.mxu0 0
    %108 = vmatprep.subr.bf16.mxu0 0
    %109 = vmatpush1.bf16.msra.mxu0 0
    %110 = vmatprep.subr.bf16.mxu0 0
    %111 = vmatpush1.bf16.msra.mxu0 0
    %112 = vmatprep.subr.bf16.mxu0 0
    %113 = vmatpush1.bf16.msra.mxu0 0
    %114 = vmatprep.subr.bf16.mxu0 0
    %115 = vmatpush1.bf16.msra.mxu0 0
    %116 = vmatprep.subr.bf16.mxu0 0
    %117 = vmatpush1.bf16.msra.mxu0 0
    %118 = vmatprep.subr.bf16.mxu0 0
    %119 = vmatpush1.bf16.msra.mxu0 0
    %120 = vmatprep.subr.bf16.mxu0 0
    %121 = vmatpush1.bf16.msra.mxu0 0
    %122 = vmatprep.subr.bf16.mxu0 0
    %123 = vmatpush1.bf16.msra.mxu0 0
    %124 = vmatprep.subr.bf16.mxu0 0
    %125 = vmatpush1.bf16.msra.mxu0 0
    %126 = vmatprep.subr.bf16.mxu0 0
    %127 = vmatpush1.bf16.msra.mxu0 0
    %128 = vmatprep.subr.bf16.mxu0 0
    %129 = vmatpush1.bf16.msra.mxu0 0
    %130 = vmatprep.mubr.bf16.mxu0 0
    %131 = vmatmul.mubr.bf16.gmra.mrb[0].mxu0 %v96
    %v132 = vpop.f32.mrb[0].mxu0
    %v133 = vadd.f32 %v63, %v132
    %v134 = vpop.f32.mrb[0].mxu0
    %v135 = vpop.f32.mrb[0].mxu0
    %v136 = vadd.f32 %v63, %v135
    %v137 = vpop.f32.mrb[0].mxu0
    %138 = vdwg.mxu0
    %v139 = vmax.f32 %v133, 0.0
    %v140 = vmax.f32 %v136, 0.0
    %v141 = vpack.c.bf16 %v140, %v139
    %v142 = vld [vmem:[%s3] sm:$0xf]
    %v143 = vld [vmem:[%s3 + $0x4] sm:$0xf]
    %v144 = vld [vmem:[%s3 + $0x8] sm:$0xf]
    %v145 = vld [vmem:[%s3 + $0xc] sm:$0xf]
    %v146 = vld [vmem:[%s3 + $0x10] sm:$0xf]
    %v147 = vld [vmem:[%s3 + $0x14] sm:$0xf]
    %v148 = vld [vmem:[%s3 + $0x18] sm:$0xf]
    %v149 = vld [vmem:[%s3 + $0x1c] sm:$0xf]
    %v150 = vld [vmem:[%s4] sm:$0x1]
    %v152 = vlaneseq
    %v153 = vshrl.u32 %v152, 7
    %v154 = vsub.s32 0, %v153
    %v155 = vrot.slane %v150, %v154
    %v165 = vunpack.c.l.b16 %v142
    %v166 = vunpack.c.l.b16 %v143
    %v167 = vunpack.c.l.b16 %v144
    %v168 = vunpack.c.l.b16 %v145
    %v169 = vunpack.c.l.b16 %v146
    %v170 = vunpack.c.l.b16 %v147
    %v171 = vunpack.c.l.b16 %v148
    %v172 = vunpack.c.l.b16 %v149
    %v173 = vpack.c.b16 %v166, %v165
    %v174 = vpack.c.b16 %v168, %v167
    %v175 = vpack.c.b16 %v170, %v169
    %v176 = vpack.c.b16 %v172, %v171
    %v182 = vsel %vm94, %v141, 0
    %184 = vmatprep.subr.bf16.mxu0 0
    %185 = vmatpush1.bf16.msra.mxu0 %v173
    %186 = vmatprep.subr.bf16.mxu0 0
    %187 = vmatpush1.bf16.msra.mxu0 %v174
    %188 = vmatprep.subr.bf16.mxu0 0
    %189 = vmatpush1.bf16.msra.mxu0 %v175
    %190 = vmatprep.subr.bf16.mxu0 0
    %191 = vmatpush1.bf16.msra.mxu0 %v176
    %192 = vmatprep.subr.bf16.mxu0 0
    %193 = vmatpush1.bf16.msra.mxu0 0
    %194 = vmatprep.subr.bf16.mxu0 0
    %195 = vmatpush1.bf16.msra.mxu0 0
    %196 = vmatprep.subr.bf16.mxu0 0
    %197 = vmatpush1.bf16.msra.mxu0 0
    %198 = vmatprep.subr.bf16.mxu0 0
    %199 = vmatpush1.bf16.msra.mxu0 0
    %200 = vmatprep.subr.bf16.mxu0 0
    %201 = vmatpush1.bf16.msra.mxu0 0
    %202 = vmatprep.subr.bf16.mxu0 0
    %203 = vmatpush1.bf16.msra.mxu0 0
    %204 = vmatprep.subr.bf16.mxu0 0
    %205 = vmatpush1.bf16.msra.mxu0 0
    %206 = vmatprep.subr.bf16.mxu0 0
    %207 = vmatpush1.bf16.msra.mxu0 0
    %208 = vmatprep.subr.bf16.mxu0 0
    %209 = vmatpush1.bf16.msra.mxu0 0
    %210 = vmatprep.subr.bf16.mxu0 0
    %211 = vmatpush1.bf16.msra.mxu0 0
    %212 = vmatprep.subr.bf16.mxu0 0
    %213 = vmatpush1.bf16.msra.mxu0 0
    %214 = vmatprep.subr.bf16.mxu0 0
    %215 = vmatpush1.bf16.msra.mxu0 0
    %216 = vmatprep.mubr.bf16.mxu0 0
    %217 = vmatmul.mubr.bf16.gmra.mrb[0].mxu0 %v182
    %v218 = vpop.f32.mrb[0].mxu0
    %v219 = vadd.f32 %v155, %v218
    %v220 = vpop.f32.mrb[0].mxu0
    %v221 = vpop.f32.mrb[0].mxu0
    %v222 = vadd.f32 %v155, %v221
    %v223 = vpop.f32.mrb[0].mxu0
    %224 = vdwg.mxu0
    %v225 = vmax.f32 %v219, 0.0
    %v226 = vmax.f32 %v222, 0.0
    %v227 = vpack.c.bf16 %v226, %v225
    %v228 = vld [vmem:[%s5] sm:$0xf]
    %v229 = vld [vmem:[%s5 + $0x4] sm:$0xf]
    %v230 = vld [vmem:[%s5 + $0x8] sm:$0xf]
    %v231 = vld [vmem:[%s5 + $0xc] sm:$0xf]
    %v232 = vld [vmem:[%s6] sm:$0x1]
    %v234 = vlaneseq
    %v235 = vshrl.u32 %v234, 7
    %v236 = vsub.s32 0, %v235
    %v237 = vrot.slane %v232, %v236
    %v243 = vunpack.c.l.b16 %v228
    %v244 = vunpack.c.l.b16 %v229
    %v245 = vunpack.c.l.b16 %v230
    %v246 = vunpack.c.l.b16 %v231
    %v247 = vpack.c.b16 %v244, %v243
    %v248 = vpack.c.b16 %v246, %v245
    %vm251 = vcmask 261120
    %v253 = vsel %vm251, %v227, 0
    %255 = vmatprep.subr.bf16.mxu0 0
    %256 = vmatpush1.bf16.msra.mxu0 %v247
    %257 = vmatprep.subr.bf16.mxu0 0
    %258 = vmatpush1.bf16.msra.mxu0 %v248
    %259 = vmatprep.subr.bf16.mxu0 0
    %260 = vmatpush1.bf16.msra.mxu0 0
    %261 = vmatprep.subr.bf16.mxu0 0
    %262 = vmatpush1.bf16.msra.mxu0 0
    %263 = vmatprep.subr.bf16.mxu0 0
    %264 = vmatpush1.bf16.msra.mxu0 0
    %265 = vmatprep.subr.bf16.mxu0 0
    %266 = vmatpush1.bf16.msra.mxu0 0
    %267 = vmatprep.subr.bf16.mxu0 0
    %268 = vmatpush1.bf16.msra.mxu0 0
    %269 = vmatprep.subr.bf16.mxu0 0
    %270 = vmatpush1.bf16.msra.mxu0 0
    %271 = vmatprep.subr.bf16.mxu0 0
    %272 = vmatpush1.bf16.msra.mxu0 0
    %273 = vmatprep.subr.bf16.mxu0 0
    %274 = vmatpush1.bf16.msra.mxu0 0
    %275 = vmatprep.subr.bf16.mxu0 0
    %276 = vmatpush1.bf16.msra.mxu0 0
    %277 = vmatprep.subr.bf16.mxu0 0
    %278 = vmatpush1.bf16.msra.mxu0 0
    %279 = vmatprep.subr.bf16.mxu0 0
    %280 = vmatpush1.bf16.msra.mxu0 0
    %281 = vmatprep.subr.bf16.mxu0 0
    %282 = vmatpush1.bf16.msra.mxu0 0
    %283 = vmatprep.subr.bf16.mxu0 0
    %284 = vmatpush1.bf16.msra.mxu0 0
    %285 = vmatprep.subr.bf16.mxu0 0
    %286 = vmatpush1.bf16.msra.mxu0 0
    %287 = vmatprep.mubr.bf16.mxu0 0
    %288 = vmatmul.mubr.bf16.gmra.mrb[0].mxu0 %v253
    %v289 = vpop.f32.mrb[0].mxu0
    %v290 = vadd.f32 %v237, %v289
    %v291 = vpop.f32.mrb[0].mxu0
    %v292 = vpop.f32.mrb[0].mxu0
    %v293 = vadd.f32 %v237, %v292
    %v294 = vpop.f32.mrb[0].mxu0
    %295 = vdwg.mxu0
    %v296 = vmax.f32 %v290, 0.0
    %v297 = vmax.f32 %v293, 0.0
    %v298 = vpack.c.bf16 %v297, %v296
    %v299 = vld [vmem:[%s7] sm:$0xf]
    %v300 = vld [vmem:[%s7 + $0x4] sm:$0xf]
    %v301 = vld [vmem:[%s7 + $0x8] sm:$0xf]
    %v302 = vld [vmem:[%s7 + $0xc] sm:$0xf]
    %v303 = vld [vmem:[%s8] sm:$0x1]
    %v305 = vlaneseq
    %v306 = vshrl.u32 %v305, 7
    %v307 = vsub.s32 0, %v306
    %v308 = vrot.slane %v303, %v307
    %v314 = vunpack.c.l.b16 %v299
    %v315 = vunpack.c.l.b16 %v300
    %v316 = vunpack.c.l.b16 %v301
    %v317 = vunpack.c.l.b16 %v302
    %v318 = vpack.c.b16 %v315, %v314
    %v319 = vpack.c.b16 %v317, %v316
    %v323 = vsel %vm251, %v298, 0
    %325 = vmatprep.subr.bf16.mxu0 0
    %326 = vmatpush1.bf16.msra.mxu0 %v318
    %327 = vmatprep.subr.bf16.mxu0 0
    %328 = vmatpush1.bf16.msra.mxu0 %v319
    %329 = vmatprep.subr.bf16.mxu0 0
    %330 = vmatpush1.bf16.msra.mxu0 0
    %331 = vmatprep.subr.bf16.mxu0 0
    %332 = vmatpush1.bf16.msra.mxu0 0
    %333 = vmatprep.subr.bf16.mxu0 0
    %334 = vmatpush1.bf16.msra.mxu0 0
    %335 = vmatprep.subr.bf16.mxu0 0
    %336 = vmatpush1.bf16.msra.mxu0 0
    %337 = vmatprep.subr.bf16.mxu0 0
    %338 = vmatpush1.bf16.msra.mxu0 0
    %339 = vmatprep.subr.bf16.mxu0 0
    %340 = vmatpush1.bf16.msra.mxu0 0
    %341 = vmatprep.subr.bf16.mxu0 0
    %342 = vmatpush1.bf16.msra.mxu0 0
    %343 = vmatprep.subr.bf16.mxu0 0
    %344 = vmatpush1.bf16.msra.mxu0 0
    %345 = vmatprep.subr.bf16.mxu0 0
    %346 = vmatpush1.bf16.msra.mxu0 0
    %347 = vmatprep.subr.bf16.mxu0 0
    %348 = vmatpush1.bf16.msra.mxu0 0
    %349 = vmatprep.subr.bf16.mxu0 0
    %350 = vmatpush1.bf16.msra.mxu0 0
    %351 = vmatprep.subr.bf16.mxu0 0
    %352 = vmatpush1.bf16.msra.mxu0 0
    %353 = vmatprep.subr.bf16.mxu0 0
    %354 = vmatpush1.bf16.msra.mxu0 0
    %355 = vmatprep.subr.bf16.mxu0 0
    %356 = vmatpush1.bf16.msra.mxu0 0
    %357 = vmatprep.mubr.bf16.mxu0 0
    %358 = vmatmul.mubr.bf16.gmra.mrb[0].mxu0 %v323
    %v359 = vpop.f32.mrb[0].mxu0
    %v360 = vadd.f32 %v308, %v359
    %v361 = vpop.f32.mrb[0].mxu0
    %v362 = vpop.f32.mrb[0].mxu0
    %v363 = vadd.f32 %v308, %v362
    %v364 = vpop.f32.mrb[0].mxu0
    %365 = vdwg.mxu0
    %366 = vst [vmem:[#allocation5] sm:$0xff] %v360
    %367 = vst [vmem:[#allocation5 + $0x8] sm:$0xff] %v363
    // Predicated region
    $region42: #{tpu_custom_call.1} parent=1 // pred_check
      _
    $region43: #{tpu_custom_call.1} parent=1 // pred_check_branch
      %369 = sbr.rel (0) target = $region45
    $region44: #{tpu_custom_call.1} parent=1 // pred_region
      %s371 = ssub.s32 256, 256
      %372 = vsyncadd [#allocation4], %s371
      %s373 = sshll.u32 [#allocation5], 4
      %s374 = int_to_ptr.vmem [resolvable:$true] %s373
      %379 = dma.vmem_to_hbm [thread:$0]  %s374, 256, %s9, [#allocation4], 128, 128, 8
    $region45: #{tpu_custom_call.1} parent=1 // pred_fallthru
      _
    // Predicated region
    $region46: #{tpu_custom_call.1} parent=1 // pred_check
      _
    $region47: #{tpu_custom_call.1} parent=1 // pred_check_branch
      %381 = sbr.rel (0) target = $region49
    $region48: #{tpu_custom_call.1} parent=1 // pred_region
      %382 = dma.done [#allocation4], 256
    $region49: #{tpu_custom_call.1} parent=1 // pred_fallthru
      _
    %383 = vsyncpa [#allocation3], 1
    %384 = vsyncpa [#allocation4], 1

</llo_original>
